<compile_context>
chip_gen: v7x
topology: tpu7x:2x2x1
jax: 0.10.0
libtpu: 0.0.40
codegen_flags: <defaults>
</compile_context>

<pallas_src>
import functools

import jax
import jax.numpy as jnp
from jax.experimental import pallas as pl
from jax.experimental.pallas import tpu as pltpu


def _round_up(v, m):
    return (v + m - 1) // m * m


# ---------------------------------------------------------------------------
# Pallas kernel: in-VMEM im2col -> single K=9*Cin matmul + BN shift + LeakyReLU
# ---------------------------------------------------------------------------
def _conv_bn_lrelu_kernel(xm_ref, xh_ref, w_ref, b_ref, o_ref, *, tm, wp):
    """One (image, flat-spatial-tile) grid step.

    xm_ref: (Cin, tm)        bf16  body of the flattened padded input tile
    xh_ref: (Cin, halo_blk)  bf16  head of the NEXT tile (supplies the halo)
    w_ref:  (Cout, 9*Cin)    bf16  conv taps, tap-major along K, BN scale folded
    b_ref:  (Cout, 1)        f32   folded BN shift
    o_ref:  (Cout, tm)       bf16  output tile (flat spatial in lanes)
    """
    # contiguous (Cin, tm + halo_blk) view of the tile + its halo
    x_all = jnp.concatenate([xm_ref[...], xh_ref[...]], axis=1)
    # in-VMEM im2col: 9 lane-shifted views stacked along K -> (9*Cin, tm)
    offs = [ky * wp + kx for ky in range(3) for kx in range(3)]
    rhs = jnp.concatenate([x_all[:, off:off + tm] for off in offs], axis=0)
    # single MXU pass, K = 9*Cin, f32 accumulation
    y = jnp.dot(w_ref[...], rhs, preferred_element_type=jnp.float32)
    y = y + b_ref[...]                                   # BN shift
    o_ref[...] = jnp.where(y >= 0.0, y, 0.2 * y).astype(o_ref.dtype)


# ---------------------------------------------------------------------------
# Wrapper: NCHW conv(3x3, pad=1, no bias) + BN(eval) + LeakyReLU(0.2)
# ---------------------------------------------------------------------------
def conv_forward(x_nchw, weight, gamma, beta, running_mean, running_var,
                 eps=1e-5, *, tm=1024, out_dtype=jnp.bfloat16):
    """x_nchw: (N, Cin, H, W); weight: (Cout, Cin, 3, 3). Returns (N, Cout, H, W)."""
    N, Cin, H, W = x_nchw.shape
    Cout = weight.shape[0]
    Wp = W + 2                           # padded width
    M_img = H * Wp                       # flat output positions / image
                                         # (incl. 2 junk cols per row, sliced later)
    halo = 2 * Wp + 2                    # extra flat positions the 9 taps need
    halo_blk = _round_up(halo, 128)      # halo fetched as whole 128-lane blocks

    # flat-spatial tile: multiple of 128 (lane-dense stores) AND of halo_blk
    # (so the halo spec's element offset (t+1)*tm is block-aligned).
    tm = max(halo_blk, _round_up(min(tm, M_img), 128))
    tm = _round_up(tm, halo_blk)
    step = tm // halo_blk
    n_tiles = -(-M_img // tm)
    L = n_tiles * tm

    # ---- single input pad (top=1, left/right=1, bottom = enough rows so the
    # last tile's halo block is in-range); no stack / no extra staging copy.
    rows_alloc = -(-(L + halo_blk) // Wp)
    x_pad = jnp.pad(x_nchw.astype(jnp.bfloat16),
                    ((0, 0), (0, 0), (1, rows_alloc - H - 1), (1, 1)))
    x_flat = x_pad.reshape(N, Cin, rows_alloc * Wp)

    # ---- weights / BatchNorm(eval) folding:
    # (Cout, Cin, 3, 3) -> (Cout, ky, kx, Cin) -> (Cout, 9*Cin), tap-major K.
    scale = gamma / jnp.sqrt(running_var + eps)          # (Cout,)
    shift = beta - running_mean * scale                  # (Cout,)
    w2 = jnp.transpose(weight, (0, 2, 3, 1)).reshape(Cout, 9 * Cin)
    w2 = (w2 * scale[:, None]).astype(jnp.bfloat16)      # fold BN scale
    bias = shift.reshape(Cout, 1).astype(jnp.float32)

    kernel = functools.partial(_conv_bn_lrelu_kernel, tm=tm, wp=Wp)

    # VMEM working set estimate (double-buffered ins/out + rhs/im2col staging);
    # raise the scoped limit only when the tile actually needs it.
    work_bytes = (2 * (Cin * tm + Cin * halo_blk + Cout * 9 * Cin) * 2   # bf16 ins, dbl-buf
                  + 2 * Cout * 4                                          # f32 bias, dbl-buf
                  + 2 * Cout * tm * 2                                     # bf16 out, dbl-buf
                  + (9 * Cin + Cin) * (tm + halo_blk) * 2                 # rhs + x_all staging
                  + Cout * tm * 4)                                        # f32 acc
    vmem_limit = int(min(96 * 2**20, max(32 * 2**20, 4 * work_bytes)))

    cost = pl.CostEstimate(
        flops=int(2 * N * Cout * 9 * Cin * L),
        transcendentals=0,
        bytes_accessed=int(x_flat.size * 2 + N * n_tiles * Cin * halo_blk * 2
                           + w2.size * 2 + bias.size * 4 + N * Cout * L * 2))

    y = pl.pallas_call(
        kernel,
        out_shape=jax.ShapeDtypeStruct((N, Cout, L), out_dtype),
        grid_spec=pltpu.PrefetchScalarGridSpec(
            num_scalar_prefetch=0,
            grid=(N, n_tiles),
            in_specs=[
                # body tile of the flattened padded input
                pl.BlockSpec((None, Cin, tm), lambda n, t: (n, 0, t)),
                # head of the NEXT tile (halo); element offset (t+1)*tm
                pl.BlockSpec((None, Cin, halo_blk),
                             lambda n, t: (n, 0, (t + 1) * step)),
                # grid-invariant weights / bias (constant index_map)
                pl.BlockSpec((Cout, 9 * Cin), lambda n, t: (0, 0)),
                pl.BlockSpec((Cout, 1), lambda n, t: (0, 0)),
            ],
            out_specs=pl.BlockSpec((None, Cout, tm), lambda n, t: (n, 0, t)),
        ),
        compiler_params=pltpu.CompilerParams(
            dimension_semantics=("parallel", "parallel"),
            vmem_limit_bytes=vmem_limit,
        ),
        cost_estimate=cost,
    )(x_flat, x_flat, w2, bias)

    # drop padded tail + the 2 junk columns per row; result is already NCHW.
    return y[:, :, :M_img].reshape(N, Cout, H, Wp)[:, :, :, :W]


# ---------------------------------------------------------------------------
# Pure-JAX reference (same semantics) for a sanity check
# ---------------------------------------------------------------------------
def _reference(x, weight, gamma, beta, mean, var, eps=1e-5, bf16_operands=True):
    scale = gamma / jnp.sqrt(var + eps)
    shift = beta - mean * scale
    w = weight * scale.reshape(-1, 1, 1, 1)
    if bf16_operands:
        x = x.astype(jnp.bfloat16).astype(jnp.float32)
        w = w.astype(jnp.bfloat16).astype(jnp.float32)
    y = jax.lax.conv_general_dilated(
        x.astype(jnp.float32), w.astype(jnp.float32),
        window_strides=(1, 1), padding=((1, 1), (1, 1)),
        dimension_numbers=("NCHW", "OIHW", "NCHW"))
    y = y + shift.reshape(1, -1, 1, 1)
    return jnp.where(y >= 0, y, 0.2 * y)


if __name__ == "__main__":
    key = jax.random.PRNGKey(0)
    kx, kw, kg, kb, km, kv = jax.random.split(key, 6)

    N, Cin, H, W = 2, 4, 16, 16
    Cout = 8

    x = jax.random.normal(kx, (N, Cin, H, W), dtype=jnp.float32)
    weight = jax.random.normal(kw, (Cout, Cin, 3, 3), dtype=jnp.float32) * (
        1.0 / jnp.sqrt(Cin * 9.0))
    gamma = 1.0 + 0.1 * jax.random.normal(kg, (Cout,), dtype=jnp.float32)
    beta = 0.1 * jax.random.normal(kb, (Cout,), dtype=jnp.float32)
    running_mean = 0.05 * jax.random.normal(km, (Cout,), dtype=jnp.float32)
    running_var = 1.0 + 0.1 * jnp.abs(jax.random.normal(kv, (Cout,), dtype=jnp.float32))

    # tm=128 -> H*(W+2)=288 flat positions/image -> 3 tiles of 128, exercising
    # the multi-tile, ragged-tail and cross-tile-halo paths.
    fwd = jax.jit(functools.partial(conv_forward, eps=1e-5, tm=128))
    out = jax.block_until_ready(fwd(x, weight, gamma, beta, running_mean, running_var))
    assert out.shape == (N, Cout, H, W), out.shape
    out_f32 = out.astype(jnp.float32)

    # tight check vs a reference using the same bf16 operands (f32 accumulation);
    # tolerance covers the kernel's bf16 output rounding.
    ref_bf16 = _reference(x, weight, gamma, beta, running_mean, running_var,
                          eps=1e-5, bf16_operands=True)
    err = float(jnp.max(jnp.abs(out_f32 - ref_bf16)))
    assert err < 2e-2, err

    # loose check vs exact f32 PyTorch semantics (bf16 operand + output rounding)
    ref_f32 = _reference(x, weight, gamma, beta, running_mean, running_var,
                         eps=1e-5, bf16_operands=False)
    assert float(jnp.max(jnp.abs(out_f32 - ref_f32))) < 0.15

    print("KERNEL_OK")
</pallas_src>

<mosaic_0001>
module attributes {stable_mosaic.version = 11 : i64} {
  func.func @_conv_bn_lrelu_kernel(%arg0: i32, %arg1: i32, %arg2: memref<1x4x128xbf16, #tpu.memory_space<vmem>>, %arg3: memref<1x4x128xbf16, #tpu.memory_space<vmem>>, %arg4: memref<8x36xbf16, #tpu.memory_space<vmem>>, %arg5: memref<8x1xf32, #tpu.memory_space<vmem>>, %arg6: memref<1x8x128xbf16, #tpu.memory_space<vmem>>) attributes {dimension_semantics = [#tpu.dimension_semantics<parallel>, #tpu.dimension_semantics<parallel>], iteration_bounds = array<i64: 2, 3>, scalar_prefetch = 0 : i64, scratch_operands = 0 : i64, tpu.core_type = #tpu.core_type<tc>, window_params = [{transform_indices = @transform_0, window_bounds = array<i64: 1, 4, 128>}, {transform_indices = @transform_1, window_bounds = array<i64: 1, 4, 128>}, {pipeline_mode = #tpu.pipeline_mode<synchronous>, transform_indices = @transform_2, window_bounds = array<i64: 8, 36>}, {pipeline_mode = #tpu.pipeline_mode<synchronous>, transform_indices = @transform_3, window_bounds = array<i64: 8, 1>}, {transform_indices = @transform_4, window_bounds = array<i64: 1, 8, 128>}]} {
    %c0 = arith.constant 0 : index
    %c0_0 = arith.constant 0 : index
    %c0_1 = arith.constant 0 : index
    %0 = vector.load %arg2[%c0, %c0_0, %c0_1] : memref<1x4x128xbf16, #tpu.memory_space<vmem>>, vector<1x4x128xbf16>
    %1 = vector.shape_cast %0 : vector<1x4x128xbf16> to vector<4x128xbf16>
    %c0_2 = arith.constant 0 : index
    %c0_3 = arith.constant 0 : index
    %c0_4 = arith.constant 0 : index
    %2 = vector.load %arg3[%c0_2, %c0_3, %c0_4] : memref<1x4x128xbf16, #tpu.memory_space<vmem>>, vector<1x4x128xbf16>
    %3 = vector.shape_cast %2 : vector<1x4x128xbf16> to vector<4x128xbf16>
    %4 = tpu.concatenate %1, %3 in 1 : vector<4x128xbf16>, vector<4x128xbf16> -> vector<4x256xbf16>
    %5 = vector.extract_strided_slice %4 {offsets = [0, 0], sizes = [4, 128], strides = [1, 1]} : vector<4x256xbf16> to vector<4x128xbf16>
    %6 = vector.extract_strided_slice %4 {offsets = [0, 1], sizes = [4, 128], strides = [1, 1]} : vector<4x256xbf16> to vector<4x128xbf16>
    %7 = vector.extract_strided_slice %4 {offsets = [0, 2], sizes = [4, 128], strides = [1, 1]} : vector<4x256xbf16> to vector<4x128xbf16>
    %8 = vector.extract_strided_slice %4 {offsets = [0, 18], sizes = [4, 128], strides = [1, 1]} : vector<4x256xbf16> to vector<4x128xbf16>
    %9 = vector.extract_strided_slice %4 {offsets = [0, 19], sizes = [4, 128], strides = [1, 1]} : vector<4x256xbf16> to vector<4x128xbf16>
    %10 = vector.extract_strided_slice %4 {offsets = [0, 20], sizes = [4, 128], strides = [1, 1]} : vector<4x256xbf16> to vector<4x128xbf16>
    %11 = vector.extract_strided_slice %4 {offsets = [0, 36], sizes = [4, 128], strides = [1, 1]} : vector<4x256xbf16> to vector<4x128xbf16>
    %12 = vector.extract_strided_slice %4 {offsets = [0, 37], sizes = [4, 128], strides = [1, 1]} : vector<4x256xbf16> to vector<4x128xbf16>
    %13 = vector.extract_strided_slice %4 {offsets = [0, 38], sizes = [4, 128], strides = [1, 1]} : vector<4x256xbf16> to vector<4x128xbf16>
    %14 = tpu.concatenate %5, %6, %7, %8, %9, %10, %11, %12, %13 in 0 : vector<4x128xbf16>, vector<4x128xbf16>, vector<4x128xbf16>, vector<4x128xbf16>, vector<4x128xbf16>, vector<4x128xbf16>, vector<4x128xbf16>, vector<4x128xbf16>, vector<4x128xbf16> -> vector<36x128xbf16>
    %c0_5 = arith.constant 0 : index
    %c0_6 = arith.constant 0 : index
    %15 = vector.load %arg4[%c0_5, %c0_6] : memref<8x36xbf16, #tpu.memory_space<vmem>>, vector<8x36xbf16>
    %cst = arith.constant dense<0.000000e+00> : vector<8x128xf32>
    %16 = tpu.matmul %15, %14, %cst {dimension_numbers = #tpu.dot_dimension_numbers<[1], [0], [0], [1], [0, 0, 1, 1], [], []>} : vector<8x36xbf16>, vector<36x128xbf16>, vector<8x128xf32> -> vector<8x128xf32>
    %c0_7 = arith.constant 0 : index
    %c0_8 = arith.constant 0 : index
    %17 = vector.load %arg5[%c0_7, %c0_8] : memref<8x1xf32, #tpu.memory_space<vmem>>, vector<8x1xf32>
    %18 = vector.broadcast %17 : vector<8x1xf32> to vector<8x128xf32>
    %19 = arith.addf %16, %18 : vector<8x128xf32>
    %cst_9 = arith.constant 0.000000e+00 : f32
    %20 = vector.broadcast %cst_9 : f32 to vector<8x128xf32>
    %21 = arith.cmpf oge, %19, %20 : vector<8x128xf32>
    %cst_10 = arith.constant 2.000000e-01 : f32
    %22 = vector.broadcast %cst_10 : f32 to vector<8x128xf32>
    %23 = arith.mulf %22, %19 : vector<8x128xf32>
    %24 = arith.select %21, %19, %23 : vector<8x128xi1>, vector<8x128xf32>
    %25 = arith.truncf %24 : vector<8x128xf32> to vector<8x128xbf16>
    %c0_11 = arith.constant 0 : index
    %c0_12 = arith.constant 0 : index
    %c0_13 = arith.constant 0 : index
    %26 = vector.load %arg6[%c0_11, %c0_12, %c0_13] : memref<1x8x128xbf16, #tpu.memory_space<vmem>>, vector<1x8x128xbf16>
    %27 = vector.shape_cast %26 : vector<1x8x128xbf16> to vector<8x128xbf16>
    %28 = vector.shape_cast %25 : vector<8x128xbf16> to vector<1x8x128xbf16>
    tpu.vector_store %arg6[%c0_11, %c0_12, %c0_13], %28 {strides = array<i32>} : memref<1x8x128xbf16, #tpu.memory_space<vmem>>, vector<1x8x128xbf16>,
    return
  }
  func.func @transform_0(%arg0: i32, %arg1: i32) -> (i32, i32, i32) {
    %c0_i32 = arith.constant 0 : i32
    %c0_i32_0 = arith.constant 0 : i32
    return %arg0, %c0_i32, %arg1 : i32, i32, i32
  }
  func.func @transform_1(%arg0: i32, %arg1: i32) -> (i32, i32, i32) {
    %c1_i32 = arith.constant 1 : i32
    %0 = arith.addi %arg1, %c1_i32 : i32
    %c1_i32_0 = arith.constant 1 : i32
    %1 = arith.muli %0, %c1_i32_0 : i32
    %c0_i32 = arith.constant 0 : i32
    %c0_i32_1 = arith.constant 0 : i32
    return %arg0, %c0_i32, %1 : i32, i32, i32
  }
  func.func @transform_2(%arg0: i32, %arg1: i32) -> (i32, i32) {
    %c0_i32 = arith.constant 0 : i32
    %c0_i32_0 = arith.constant 0 : i32
    %c0_i32_1 = arith.constant 0 : i32
    return %c0_i32, %c0_i32_0 : i32, i32
  }
  func.func @transform_3(%arg0: i32, %arg1: i32) -> (i32, i32) {
    %c0_i32 = arith.constant 0 : i32
    %c0_i32_0 = arith.constant 0 : i32
    %c0_i32_1 = arith.constant 0 : i32
    return %c0_i32, %c0_i32_0 : i32, i32
  }
  func.func @transform_4(%arg0: i32, %arg1: i32) -> (i32, i32, i32) {
    %c0_i32 = arith.constant 0 : i32
    %c0_i32_0 = arith.constant 0 : i32
    return %arg0, %c0_i32, %arg1 : i32, i32, i32
  }
}

</mosaic_0001>

<llo_original>
// kernel: conv_forward.1
$region0: #{conv_forward.1}
  #allocation0 [shape = 'u32[]', space=smem, size = 0x4, offset = 0x4, fixed_abs, tag = 'smem constant byte address 0x4 - core index']
  #allocation1 [shape = 'u32[144,128]{1,0:T(1,128)}', space=vmem, size = 0x12000, scoped, tag = 'internal scratch']
  %s0 = inlined_call_operand.vmem [shape: bf16[2,4,522], index: 0, kind: input, shape index: {}, may-alias: {0,1}]
  %s1 = inlined_call_operand.vmem [shape: bf16[2,4,522], index: 1, kind: input, shape index: {}, may-alias: {0,1}]
  %s2 = inlined_call_operand.vmem [shape: bf16[8,36], index: 2, kind: input, shape index: {}]
  %s3 = inlined_call_operand.vmem [shape: f32[8,1], index: 3, kind: input, shape index: {}]
  %s4 = inlined_call_operand.vmem [shape: bf16[2,8,384], index: 4, kind: output, shape index: {}]
  %s5 = sld [smem:[#allocation0]]
  $region49: #{conv_forward.1} parent=0
    _
  %s7 = ssub.s32 1, %s5
  %s8 = scalar_select 0, %s7, %s5
  loop: start=0, step=1, limit=8
  $region2: #{conv_forward.1} parent=0 // loop_pre_header
    _
  $region3: #{conv_forward.1} parent=0 // loop_header
    %s10 = sphi 0, %s14
    %p11 = scmp.ge.s32.totalorder %s10, 8
    %s17 = sphi 0, %s29
    %s18 = sphi 0, %s25
    %s19 = sphi 0, %s17
    %s20 = sphi 0, %s18
    %s21 = sphi 0, %s19
    %s22 = sphi 0, %s20
    %s34 = sphi 0, %s36
    %s37 = sphi 0, %s34
    %s38 = sphi 0, %s37
    %s54 = sphi 0, %s38
    %s64 = sphi 0, %s66
    %s67 = sphi 0, %s64
    %s68 = sphi 0, %s67
    %s84 = sphi 0, %s68
    %s88 = sphi 0, %s88
    %s90 = sphi 0, %s88
    %s91 = sphi 0, %s90
    %s105 = sphi 0, %s91
    %s109 = sphi 0, %s109
    %s111 = sphi 0, %s109
    %s112 = sphi 0, %s111
    %s126 = sphi 0, %s112
    %s134 = sphi 0, %s136
    %s137 = sphi 0, %s134
    %s138 = sphi 0, %s137
    %s154 = sphi 0, %s138
  $region4: #{conv_forward.1} parent=0 // loop_header_branch
    %13 = sbr.rel (%p11) target = $region8
  $region5: #{conv_forward.1} parent=0 // loop_body
    %s15 = ssub.s32 %s10, 1
    %s16 = ssub.s32 %s10, 2
    %s23 = sadd.s32 1, %s18
    %p24 = scmp.ge.s32.totalorder %s23, 3
    %s25 = scalar_select %p24, 0, %s23
    %s26 = sadd.s32 1, %s17
    %s27 = scalar_select %p24, %s26, %s17
    %p28 = scmp.ge.s32.totalorder %s27, 2
    %s29 = scalar_select %p28, 0, %s27
    %s30 = ssub.s32 %s17, %s29
    %s31 = ssub.s32 %s18, %s25
    %s32 = sor.u32 %s30, %s31
    %p33 = scmp.eq.s32.totalorder %s32, 0
    %s35 = sadd.s32 %s34, 1
    %s36 = scalar_select %p33, %s34, %s35
    %p39 = pneg %p33
    %p40 = scmp.eq.s32.totalorder %s10, 5
    %p41 = por %p39, %p40
    %p42 = scmp.ne.s32.totalorder %s34, %s37
    %p43 = scmp.eq.s32.totalorder %s10, 0
    %p44 = por %p42, %p43
    %p45 = scmp.ne.s32.totalorder %s34, %s37
    %p46 = scmp.eq.s32.totalorder %s15, 5
    %p47 = por %p45, %p46
    %p48 = scmp.ne.s32.totalorder %s37, %s38
    %p49 = scmp.eq.s32.totalorder %s15, 0
    %p50 = por %p48, %p49
    %p51 = scmp.ne.s32.totalorder %s37, %s38
    %p52 = scmp.eq.s32.totalorder %s16, 5
    %p53 = por %p51, %p52
    %p55 = scmp.ne.s32.totalorder %s38, %s54
    %p56 = scmp.eq.s32.totalorder %s16, 0
    %p57 = por %p55, %p56
    %s58 = sadd.s32 %s18, 1
    %s59 = sadd.s32 %s25, 1
    %s60 = ssub.s32 %s17, %s29
    %s61 = ssub.s32 %s58, %s59
    %s62 = sor.u32 %s60, %s61
    %p63 = scmp.eq.s32.totalorder %s62, 0
    %s65 = sadd.s32 %s64, 1
    %s66 = scalar_select %p63, %s64, %s65
    %p69 = pneg %p63
    %p70 = scmp.eq.s32.totalorder %s10, 5
    %p71 = por %p69, %p70
    %p72 = scmp.ne.s32.totalorder %s64, %s67
    %p73 = scmp.eq.s32.totalorder %s10, 0
    %p74 = por %p72, %p73
    %p75 = scmp.ne.s32.totalorder %s64, %s67
    %p76 = scmp.eq.s32.totalorder %s15, 5
    %p77 = por %p75, %p76
    %p78 = scmp.ne.s32.totalorder %s67, %s68
    %p79 = scmp.eq.s32.totalorder %s15, 0
    %p80 = por %p78, %p79
    %p81 = scmp.ne.s32.totalorder %s67, %s68
    %p82 = scmp.eq.s32.totalorder %s16, 5
    %p83 = por %p81, %p82
    %p85 = scmp.ne.s32.totalorder %s68, %s84
    %p86 = scmp.eq.s32.totalorder %s16, 0
    %p87 = por %p85, %p86
    %s89 = sadd.s32 %s88, 1
    %p92 = scmp.eq.s32.totalorder %s10, 5
    %p93 = scmp.ne.s32.totalorder %s88, %s90
    %p94 = scmp.eq.s32.totalorder %s10, 0
    %p95 = por %p93, %p94
    %p96 = scmp.ne.s32.totalorder %s88, %s90
    %p97 = scmp.eq.s32.totalorder %s15, 5
    %p98 = por %p96, %p97
    %p99 = scmp.ne.s32.totalorder %s90, %s91
    %p100 = scmp.eq.s32.totalorder %s15, 0
    %p101 = por %p99, %p100
    %p102 = scmp.ne.s32.totalorder %s90, %s91
    %p103 = scmp.eq.s32.totalorder %s16, 5
    %p104 = por %p102, %p103
    %p106 = scmp.ne.s32.totalorder %s91, %s105
    %p107 = scmp.eq.s32.totalorder %s16, 0
    %p108 = por %p106, %p107
    %s110 = sadd.s32 %s109, 1
    %p113 = scmp.eq.s32.totalorder %s10, 5
    %p114 = scmp.ne.s32.totalorder %s109, %s111
    %p115 = scmp.eq.s32.totalorder %s10, 0
    %p116 = por %p114, %p115
    %p117 = scmp.ne.s32.totalorder %s109, %s111
    %p118 = scmp.eq.s32.totalorder %s15, 5
    %p119 = por %p117, %p118
    %p120 = scmp.ne.s32.totalorder %s111, %s112
    %p121 = scmp.eq.s32.totalorder %s15, 0
    %p122 = por %p120, %p121
    %p123 = scmp.ne.s32.totalorder %s111, %s112
    %p124 = scmp.eq.s32.totalorder %s16, 5
    %p125 = por %p123, %p124
    %p127 = scmp.ne.s32.totalorder %s112, %s126
    %p128 = scmp.eq.s32.totalorder %s16, 0
    %p129 = por %p127, %p128
    %s130 = ssub.s32 %s17, %s29
    %s131 = ssub.s32 %s18, %s25
    %s132 = sor.u32 %s130, %s131
    %p133 = scmp.eq.s32.totalorder %s132, 0
    %s135 = sadd.s32 %s134, 1
    %s136 = scalar_select %p133, %s134, %s135
    %p139 = pneg %p133
    %p140 = scmp.eq.s32.totalorder %s10, 5
    %p141 = por %p139, %p140
    %p142 = scmp.ne.s32.totalorder %s134, %s137
    %p143 = scmp.eq.s32.totalorder %s10, 0
    %p144 = por %p142, %p143
    %p145 = scmp.ne.s32.totalorder %s134, %s137
    %p146 = scmp.eq.s32.totalorder %s15, 5
    %p147 = por %p145, %p146
    %p148 = scmp.ne.s32.totalorder %s137, %s138
    %p149 = scmp.eq.s32.totalorder %s15, 0
    %p150 = por %p148, %p149
    %p151 = scmp.ne.s32.totalorder %s137, %s138
    %p152 = scmp.eq.s32.totalorder %s16, 5
    %p153 = por %p151, %p152
    %p155 = scmp.ne.s32.totalorder %s138, %s154
    %p156 = scmp.eq.s32.totalorder %s16, 0
    %p157 = por %p155, %p156
    %p158 = scmp.le.s32.totalorder 1, %s10
    %p159 = scmp.lt.s32.totalorder %s10, 7
    %p160 = pnand %p158, %p159
    %p161 = pneg %p160
    // Predicated region
    $region9: #{conv_forward.1} parent=5 // pred_check
      _
    $region10: #{conv_forward.1} parent=5 // pred_check_branch
      %163 = sbr.rel (%p160) target = $region12
    $region11: #{conv_forward.1} parent=5 // pred_region
      %s164 = ssub.s32 %s10, 1
      // Predicated region
      $region13: #{conv_forward.1} parent=11 // pred_check
        %p165 = pneg %p101
      $region14: #{conv_forward.1} parent=11 // pred_check_branch
        %167 = sbr.rel (%p165) target = $region16
      $region15: #{conv_forward.1} parent=11 // pred_region
        _
      $region16: #{conv_forward.1} parent=11 // pred_fallthru
        _
      // Predicated region
      $region17: #{conv_forward.1} parent=11 // pred_check
        %p168 = pneg %p122
      $region18: #{conv_forward.1} parent=11 // pred_check_branch
        %170 = sbr.rel (%p168) target = $region20
      $region19: #{conv_forward.1} parent=11 // pred_region
        _
      $region20: #{conv_forward.1} parent=11 // pred_fallthru
        _
    $region12: #{conv_forward.1} parent=5 // pred_fallthru
      _
    %p171 = scmp.lt.s32.totalorder %s10, 6
    // Predicated region
    $region21: #{conv_forward.1} parent=5 // pred_check
      %p172 = pneg %p171
    $region22: #{conv_forward.1} parent=5 // pred_check_branch
      %174 = sbr.rel (%p172) target = $region24
    $region23: #{conv_forward.1} parent=5 // pred_region
      // Predicated region
      $region25: #{conv_forward.1} parent=23 // pred_check
        %p175 = pneg %p44
      $region26: #{conv_forward.1} parent=23 // pred_check_branch
        %177 = sbr.rel (%p175) target = $region28
      $region27: #{conv_forward.1} parent=23 // pred_region
        %p178 = scmp.lt.s32.totalorder %s17, 1
        %s179 = scalar_select %p178, %s17, 1
        %p180 = scmp.lt.s32.totalorder %s18, 4
        %s181 = scalar_select %p180, %s18, 4
        %s182 = smul.addr %s179, 5
        %s183 = sadd.s32 %s181, %s182
        %s184 = smul.addr %s183, 2
        %s185 = scalar_lea.vmem %s0, %s184
      $region28: #{conv_forward.1} parent=23 // pred_fallthru
        _
      // Predicated region
      $region29: #{conv_forward.1} parent=23 // pred_check
        %p186 = pneg %p74
      $region30: #{conv_forward.1} parent=23 // pred_check_branch
        %188 = sbr.rel (%p186) target = $region32
      $region31: #{conv_forward.1} parent=23 // pred_region
        %s189 = sadd.s32 %s18, 1
        %p190 = scmp.lt.s32.totalorder %s17, 1
        %s191 = scalar_select %p190, %s17, 1
        %p192 = scmp.lt.s32.totalorder %s189, 4
        %s193 = scalar_select %p192, %s189, 4
        %s194 = smul.addr %s191, 5
        %s195 = sadd.s32 %s193, %s194
        %s196 = smul.addr %s195, 2
        %s197 = scalar_lea.vmem %s1, %s196
        %s198 = sadd.s32 %s18, 1
      $region32: #{conv_forward.1} parent=23 // pred_fallthru
        _
    $region24: #{conv_forward.1} parent=5 // pred_fallthru
      _
    %p199 = scmp.le.s32.totalorder 1, %s10
    %p200 = scmp.lt.s32.totalorder %s10, 7
    %p201 = pnand %p199, %p200
    %p202 = pneg %p201
    // Predicated region
    $region33: #{conv_forward.1} parent=5 // pred_check
      _
    $region34: #{conv_forward.1} parent=5 // pred_check_branch
      %204 = sbr.rel (%p201) target = $region36
    $region35: #{conv_forward.1} parent=5 // pred_region
      %s205 = ssub.s32 %s10, 1
      %p206 = scmp.lt.s32.totalorder %s19, 1
      %s207 = scalar_select %p206, %s19, 1
      %p208 = scmp.lt.s32.totalorder %s20, 4
      %s209 = scalar_select %p208, %s20, 4
      %s210 = smul.addr %s207, 5
      %s211 = sadd.s32 %s209, %s210
      %s212 = smul.addr %s211, 2
      %s213 = scalar_lea.vmem %s0, %s212
      %p214 = pneg %p50
      %p215 = pneg %p47
      %s216 = sadd.s32 %s20, 1
      %p217 = scmp.lt.s32.totalorder %s19, 1
      %s218 = scalar_select %p217, %s19, 1
      %p219 = scmp.lt.s32.totalorder %s216, 4
      %s220 = scalar_select %p219, %s216, 4
      %s221 = smul.addr %s218, 5
      %s222 = sadd.s32 %s220, %s221
      %s223 = smul.addr %s222, 2
      %s224 = scalar_lea.vmem %s1, %s223
      %p225 = pneg %p80
      %p226 = pneg %p77
      %p227 = pneg %p101
      %p228 = pneg %p98
      %p229 = pneg %p122
      %p230 = pneg %p119
      %p231 = pneg %p150
      %p232 = pneg %p147
      %p233 = scmp.lt.s32.totalorder %s19, 1
      %s234 = scalar_select %p233, %s19, 1
      %p235 = scmp.lt.s32.totalorder %s20, 2
      %s236 = scalar_select %p235, %s20, 2
      %s237 = smul.addr %s234, 3
      %s238 = sadd.s32 %s236, %s237
      %s239 = smul.addr %s238, 4
      %s240 = scalar_lea.vmem %s4, %s239
      %p241 = scmp.lt.s32.totalorder %s19, 1
      %s242 = scalar_select %p241, %s19, 1
      %p243 = scmp.lt.s32.totalorder %s20, 4
      %s244 = scalar_select %p243, %s20, 4
      %s245 = smul.addr %s242, 5
      %s246 = sadd.s32 %s244, %s245
      %s247 = smul.addr %s246, 2
      %s248 = scalar_lea.vmem %s0, %s247
      %s249 = sadd.s32 %s20, 1
      %p250 = scmp.lt.s32.totalorder %s19, 1
      %s251 = scalar_select %p250, %s19, 1
      %p252 = scmp.lt.s32.totalorder %s249, 4
      %s253 = scalar_select %p252, %s249, 4
      %s254 = smul.addr %s251, 5
      %s255 = sadd.s32 %s253, %s254
      %s256 = smul.addr %s255, 2
      %s257 = scalar_lea.vmem %s1, %s256
      %s258 = sadd.s32 %s20, 1
      %p259 = scmp.lt.s32.totalorder %s19, 1
      %s260 = scalar_select %p259, %s19, 1
      %p261 = scmp.lt.s32.totalorder %s20, 2
      %s262 = scalar_select %p261, %s20, 2
      %s263 = smul.addr %s260, 3
      %s264 = sadd.s32 %s262, %s263
      %s265 = smul.addr %s264, 4
      %s266 = scalar_lea.vmem %s4, %s265
      %v268 = vld [vmem:[%s248] sm:$0x3]
      %v269 = vld [vmem:[%s257] sm:$0x3]
      %v272 = vrot.slane %v268, 6
      %v273 = vrot.slane %v269, 6
      %274 = vrot.lane.b32.xlu0 %v272, 127
      %v275 = vpop.permute.xlu0 %274
      %276 = vrot.lane.b32.xlu0 %v273, 127
      %v277 = vpop.permute.xlu0 %276
      %vm278 = vcmask 1039360
      %v279 = vsel %vm278, %v275, %v277
      %v280 = vrot.slane %v268, 4
      %v281 = vrot.slane %v269, 4
      %282 = vrot.lane.b32.xlu0 %v280, 126
      %v283 = vpop.permute.xlu0 %282
      %284 = vrot.lane.b32.xlu0 %v281, 126
      %v285 = vpop.permute.xlu0 %284
      %vm286 = vcmask 1031168
      %v287 = vsel %vm286, %v283, %v285
      %v288 = vrot.slane %v268, 2
      %v289 = vrot.slane %v269, 2
      %290 = vrot.lane.b32.xlu0 %v288, 110
      %v291 = vpop.permute.xlu0 %290
      %292 = vrot.lane.b32.xlu0 %v289, 110
      %v293 = vpop.permute.xlu0 %292
      %vm294 = vcmask 900096
      %v295 = vsel %vm294, %v291, %v293
      %296 = vrot.lane.b32.xlu0 %v268, 109
      %v297 = vpop.permute.xlu0 %296
      %298 = vrot.lane.b32.xlu0 %v269, 109
      %v299 = vpop.permute.xlu0 %298
      %vm300 = vcmask 891904
      %v301 = vsel %vm300, %v297, %v299
      %302 = vrot.lane.b32.xlu0 %v272, 108
      %v303 = vpop.permute.xlu0 %302
      %304 = vrot.lane.b32.xlu0 %v273, 108
      %v305 = vpop.permute.xlu0 %304
      %vm306 = vcmask 883712
      %v307 = vsel %vm306, %v303, %v305
      %308 = vrot.lane.b32.xlu0 %v280, 92
      %v309 = vpop.permute.xlu0 %308
      %310 = vrot.lane.b32.xlu0 %v281, 92
      %v311 = vpop.permute.xlu0 %310
      %vm312 = vcmask 752640
      %v313 = vsel %vm312, %v309, %v311
      %314 = vrot.lane.b32.xlu0 %v288, 91
      %v315 = vpop.permute.xlu0 %314
      %316 = vrot.lane.b32.xlu0 %v289, 91
      %v317 = vpop.permute.xlu0 %316
      %vm318 = vcmask 744448
      %v319 = vsel %vm318, %v315, %v317
      %320 = vrot.lane.b32.xlu0 %v268, 90
      %v321 = vpop.permute.xlu0 %320
      %322 = vrot.lane.b32.xlu0 %v269, 90
      %v323 = vpop.permute.xlu0 %322
      %vm324 = vcmask 736256
      %v325 = vsel %vm324, %v321, %v323
      %vm326 = vcmask 1041408
      %v329 = vsel %vm326, %v268, %v279
      %vm330 = vcmask 1043456
      %v332 = vsel %vm330, %v329, %v287
      %vm333 = vcmask 1045504
      %v335 = vsel %vm333, %v332, %v295
      %v339 = vsel %vm326, %v301, %v307
      %v341 = vsel %vm330, %v339, %v313
      %v343 = vsel %vm333, %v341, %v319
      %v345 = vld [vmem:[%s2] sm:$0xf]
      %v346 = vld [vmem:[%s3] sm:$0xff]
      %348 = vset.pattern.permute.xlu0 0
      %349 = vperm.xlu0 %348, %v346
      %v350 = vpop.permute.xlu0 %349
      %vm352 = vcmask 293888
      %v354 = vsel %vm352, %v345, 0
      %v357 = vsel %vm326, %v325, 0
      %359 = vmatprep.subr.bf16.mxu0 0
      %360 = vmatpush1.bf16.msra.mxu0 %v335
      %361 = vmatprep.subr.bf16.mxu0 0
      %362 = vmatpush1.bf16.msra.mxu0 %v343
      %363 = vmatprep.subr.bf16.mxu0 0
      %364 = vmatpush1.bf16.msra.mxu0 %v357
      %365 = vmatprep.subr.bf16.mxu0 0
      %366 = vmatpush1.bf16.msra.mxu0 0
      %367 = vmatprep.subr.bf16.mxu0 0
      %368 = vmatpush1.bf16.msra.mxu0 0
      %369 = vmatprep.subr.bf16.mxu0 0
      %370 = vmatpush1.bf16.msra.mxu0 0
      %371 = vmatprep.subr.bf16.mxu0 0
      %372 = vmatpush1.bf16.msra.mxu0 0
      %373 = vmatprep.subr.bf16.mxu0 0
      %374 = vmatpush1.bf16.msra.mxu0 0
      %375 = vmatprep.subr.bf16.mxu0 0
      %376 = vmatpush1.bf16.msra.mxu0 0
      %377 = vmatprep.subr.bf16.mxu0 0
      %378 = vmatpush1.bf16.msra.mxu0 0
      %379 = vmatprep.subr.bf16.mxu0 0
      %380 = vmatpush1.bf16.msra.mxu0 0
      %381 = vmatprep.subr.bf16.mxu0 0
      %382 = vmatpush1.bf16.msra.mxu0 0
      %383 = vmatprep.subr.bf16.mxu0 0
      %384 = vmatpush1.bf16.msra.mxu0 0
      %385 = vmatprep.subr.bf16.mxu0 0
      %386 = vmatpush1.bf16.msra.mxu0 0
      %387 = vmatprep.subr.bf16.mxu0 0
      %388 = vmatpush1.bf16.msra.mxu0 0
      %389 = vmatprep.subr.bf16.mxu0 0
      %390 = vmatpush1.bf16.msra.mxu0 0
      %391 = vmatprep.mubr.bf16.mxu0 0
      %392 = vmatmul.mubr.bf16.gmra.mrb[0].mxu0 %v354
      %v393 = vpop.f32.mrb[0].mxu0
      %v394 = vadd.f32 %v350, %v393
      %v395 = vpop.f32.mrb[0].mxu0
      %v396 = vpop.f32.mrb[0].mxu0
      %v397 = vpop.f32.mrb[0].mxu0
      %398 = vdwg.mxu0
      %vm399 = vcmp.ge.f32.partialorder %v394, 0.0
      %v400 = vmul.f32 %v394, 0.2
      %v401 = vsel %vm399, %v394, %v400
      %v402 = vpack.c.bf16 %v401, %v401
      %403 = vst [vmem:[%s266] sm:$0xf] %v402
      %p404 = scmp.lt.s32.totalorder %s19, 1
      %s405 = scalar_select %p404, %s19, 1
      %p406 = scmp.lt.s32.totalorder %s20, 2
      %s407 = scalar_select %p406, %s20, 2
      %s408 = smul.addr %s405, 3
      %s409 = sadd.s32 %s407, %s408
      %s410 = smul.addr %s409, 4
      %s411 = scalar_lea.vmem %s4, %s410
      // Predicated region
      $region37: #{conv_forward.1} parent=35 // pred_check
        %p412 = pneg %p147
      $region38: #{conv_forward.1} parent=35 // pred_check_branch
        %414 = sbr.rel (%p412) target = $region40
      $region39: #{conv_forward.1} parent=35 // pred_region
        _
      $region40: #{conv_forward.1} parent=35 // pred_fallthru
        _
    $region36: #{conv_forward.1} parent=5 // pred_fallthru
      _
    %p415 = scmp.le.s32.totalorder 2, %s10
    // Predicated region
    $region41: #{conv_forward.1} parent=5 // pred_check
      %p416 = pneg %p415
    $region42: #{conv_forward.1} parent=5 // pred_check_branch
      %418 = sbr.rel (%p416) target = $region44
    $region43: #{conv_forward.1} parent=5 // pred_region
      %s419 = ssub.s32 %s10, 2
      // Predicated region
      $region45: #{conv_forward.1} parent=43 // pred_check
        %p420 = pneg %p153
      $region46: #{conv_forward.1} parent=43 // pred_check_branch
        %422 = sbr.rel (%p420) target = $region48
      $region47: #{conv_forward.1} parent=43 // pred_region
        %p423 = scmp.lt.s32.totalorder %s21, 1
        %s424 = scalar_select %p423, %s21, 1
        %p425 = scmp.lt.s32.totalorder %s22, 2
        %s426 = scalar_select %p425, %s22, 2
        %s427 = smul.addr %s424, 3
        %s428 = sadd.s32 %s426, %s427
        %s429 = smul.addr %s428, 4
        %s430 = scalar_lea.vmem %s4, %s429
      $region48: #{conv_forward.1} parent=43 // pred_fallthru
        _
    $region44: #{conv_forward.1} parent=5 // pred_fallthru
      _
  $region6: #{conv_forward.1} parent=0 // loop_footer
    %s14 = sadd.s32 1, %s10
  $region7: #{conv_forward.1} parent=0 // loop_footer_branch
    %9 = sbr.rel target = $region3
  $region8: #{conv_forward.1} parent=0 // loop_exit
    _

</llo_original>
